<compile_context>
chip_gen: v7x
topology: tpu7x:2x2x1
jax: 0.10.0
libtpu: 0.0.40
codegen_flags: <defaults>
</compile_context>

<pallas_src>
import functools

import jax
import jax.numpy as jnp
from jax.experimental import pallas as pl
from jax.experimental.pallas import tpu as pltpu


def _int_pow(x, p):
    """x ** p for a static positive integer p (binary exponentiation, VPU only)."""
    result = None
    base = x
    while p:
        if p & 1:
            result = base if result is None else result * base
        p >>= 1
        if p:
            base = base * base
    return result


def _toploss_kernel(*refs, penal, penal_is_int, has_area, n_elems, nblocks):
    if has_area:
        vf_ref, phi_ref, area_ref, obj_out, vfa_out, obj_acc, vfa_acc = refs
    else:
        vf_ref, phi_ref, obj_out, vfa_out, obj_acc, vfa_acc = refs
        area_ref = None

    c = pl.program_id(0)          # N-slice (TensorCore) index
    i = pl.program_id(1)          # step within the slice
    steps = pl.num_programs(1)
    blk = c * steps + i           # logical block index along N

    # Zero this slice's resident accumulator slabs on its first step.
    @pl.when(i == 0)
    def _():
        obj_acc[...] = jnp.zeros_like(obj_acc)
        vfa_acc[...] = jnp.zeros_like(vfa_acc)

    vf = vf_ref[...]              # (M, bn) f32, elements on the lane axis
    phi = phi_ref[...]            # (M, bn) f32
    area = area_ref[...] if has_area else None   # (1, bn) f32 or None

    def accumulate(vf_obj, phi_v, mass_term):
        if penal_is_int:
            vf_pow = _int_pow(vf_obj, int(penal))        # static VPU multiplies
        else:
            # Explicit exp/log (EUP) path for non-integer exponents.
            vf_pow = jnp.exp(penal * jnp.log(vf_obj))
        r = pl.reciprocal(vf_pow, approx=True)           # EUP slot (cheap)
        r = r * (2.0 - vf_pow * r)                       # 1 Newton step -> ~f32 exact
        obj_acc[...] += phi_v * r
        vfa_acc[...] += mass_term

    # Interior (full) blocks: no masking work at all.
    @pl.when(blk < nblocks - 1)
    def _():
        if has_area:
            accumulate(vf, phi, vf * area)
        else:
            accumulate(vf, phi, vf)

    # Last block of N (possibly partial) and any fully-OOB step produced by
    # the clamped index_map: mask the ragged tail before the reciprocal and
    # before BOTH the objective and mass accumulations.
    @pl.when(blk >= nblocks - 1)
    def _():
        bn = vf.shape[1]
        lane = jax.lax.broadcasted_iota(jnp.int32, vf.shape, 1)
        valid = (blk * bn + lane) < n_elems
        vf_obj = jnp.where(valid, vf, 1.0)       # safe under pow / reciprocal
        phi_m = jnp.where(valid, phi, 0.0)
        if has_area:
            mass_term = jnp.where(valid, vf * area, 0.0)
        else:
            mass_term = jnp.where(valid, vf, 0.0)
        accumulate(vf_obj, phi_m, mass_term)

    # Epilogue: one cross-lane reduce per N-slice (idle XLU slot); only tiny
    # (M, 1) partial results ever hit HBM.
    @pl.when(i == steps - 1)
    def _():
        obj_out[...] = jnp.sum(obj_acc[...], axis=1, keepdims=True)
        vfa_out[...] = jnp.sum(vfa_acc[...], axis=1, keepdims=True)


def _auto_n_split():
    """2 on multi-TensorCore chips (v4 / v5p / v7x), else 1."""
    try:
        kind = jax.devices()[0].device_kind.lower()
    except Exception:
        return 1
    if "lite" in kind or "v5e" in kind or "v6" in kind:
        return 1
    if "v7" in kind or "v4" in kind or "v5p" in kind:
        return 2
    return 1


def top_opt_loss(volFracNN, phiElem, desiredMass, densityOfMaterial, elemArea,
                 penal, numMaterials, *, block_n=32768, n_split=None,
                 vmem_budget_bytes=24 << 20):
    """volFracNN: (N, M); phiElem: (M, N); densityOfMaterial: (M,);
    elemArea: (N,) or scalar; penal: python number; numMaterials == M."""
    N, M = volFracNN.shape
    assert M == numMaterials
    assert phiElem.shape == (M, N)

    # cast + transpose fuse into a single XLA copy; no extra wrapper passes.
    vf = volFracNN.astype(jnp.float32).T                 # (M, N) lane-dense
    phi = phiElem.astype(jnp.float32)                    # (M, N)
    area = jnp.asarray(elemArea, jnp.float32)
    has_area = area.size > 1

    if n_split is None:
        n_split = _auto_n_split()

    # --- block sizing: N on the lane axis, VMEM-capped ----------------------
    m_pad = ((M + 7) // 8) * 8                           # sublane-padded rows
    # per lane-column: vf+phi double-buffered inputs (4x) + 2 scratch slabs
    # (+ area row double-buffered, padded to 8 sublanes).
    bytes_per_col = 6 * m_pad * 4 + (2 * 8 * 4 if has_area else 0)
    bn_vmem_cap = max(128, int(vmem_budget_bytes) // bytes_per_col)
    bn_cap = max(128, min(int(block_n), bn_vmem_cap))
    bn_cap -= bn_cap % 128
    if N <= bn_cap:
        bn = N                                           # single full-extent block
        n_split = 1
    else:
        bn = bn_cap

    nblocks = pl.cdiv(N, bn)
    n_split = max(1, min(int(n_split), nblocks))
    steps = pl.cdiv(nblocks, n_split)

    def in_map(c, i):
        # Clamp so fully out-of-bounds steps (when nblocks % n_split != 0)
        # simply re-fetch the last valid block; the kernel masks them to zero.
        return (0, jnp.minimum(c * steps + i, nblocks - 1))

    inputs = [vf, phi]
    in_specs = [pl.BlockSpec((M, bn), in_map),
                pl.BlockSpec((M, bn), in_map)]
    if has_area:
        inputs.append(area.reshape(1, N))
        in_specs.append(pl.BlockSpec((1, bn), in_map))

    penal_f = float(penal)
    penal_is_int = penal_f.is_integer() and penal_f >= 1.0

    kernel = functools.partial(
        _toploss_kernel, penal=penal_f, penal_is_int=penal_is_int,
        has_area=has_area, n_elems=N, nblocks=nblocks)

    vmem_est = bytes_per_col * bn + (1 << 20)
    vmem_limit = int(min(max(2 * vmem_est, 32 << 20), 56 << 20))

    obj_part, vfa_part = pl.pallas_call(
        kernel,
        out_shape=(
            jax.ShapeDtypeStruct((n_split, M, 1), jnp.float32),
            jax.ShapeDtypeStruct((n_split, M, 1), jnp.float32),
        ),
        grid_spec=pltpu.PrefetchScalarGridSpec(
            num_scalar_prefetch=0,
            grid=(n_split, steps),
            in_specs=in_specs,
            out_specs=[
                pl.BlockSpec((None, M, 1), lambda c, i: (c, 0, 0)),
                pl.BlockSpec((None, M, 1), lambda c, i: (c, 0, 0)),
            ],
            scratch_shapes=[
                pltpu.VMEM((M, bn), jnp.float32),   # objective accumulator slab
                pltpu.VMEM((M, bn), jnp.float32),   # vf(*area) accumulator slab
            ],
        ),
        compiler_params=pltpu.CompilerParams(
            dimension_semantics=("parallel", "arbitrary"),
            vmem_limit_bytes=vmem_limit),
    )(*inputs)

    # Tiny final math (negligible next to the streamed data).
    objective = jnp.sum(obj_part, axis=(0, 2))           # (M,)
    vf_area = jnp.sum(vfa_part, axis=(0, 2))             # (M,)
    if not has_area:
        vf_area = vf_area * area.reshape(())             # scalar area folded here
    mass_total = jnp.sum(densityOfMaterial.astype(jnp.float32) * vf_area)
    mass_constraint = mass_total / desiredMass - 1.0
    return objective, mass_constraint


def _reference(volFracNN, phiElem, desiredMass, densityOfMaterial, elemArea,
               penal, M):
    vf = volFracNN.astype(jnp.float32)
    obj = jnp.stack([jnp.sum(phiElem[i] / (vf[:, i] ** penal))
                     for i in range(M)])
    mass = jnp.stack([jnp.sum(densityOfMaterial[i] * vf[:, i] * elemArea)
                      for i in range(M)])
    return obj, jnp.sum(mass) / desiredMass - 1.0


if __name__ == "__main__":
    key = jax.random.PRNGKey(0)
    k1, k2, k3, k4 = jax.random.split(key, 4)

    # --- test 1: demo shapes, integer penal, per-element area, defaults -----
    N, M = 512, 4
    penal = 3.0
    volFracNN = 0.1 + 0.9 * jax.random.uniform(k1, (N, M), jnp.float32)
    phiElem = jax.random.uniform(k2, (M, N), jnp.float32)
    densityOfMaterial = jnp.array([1.0, 0.7, 0.4, 0.2], jnp.float32)
    elemArea = jnp.full((N,), 0.25, jnp.float32)
    desiredMass = 50.0

    obj, mc = top_opt_loss(volFracNN, phiElem, desiredMass, densityOfMaterial,
                           elemArea, penal, M)
    jax.block_until_ready((obj, mc))
    obj_r, mc_r = _reference(volFracNN, phiElem, desiredMass,
                             densityOfMaterial, elemArea, penal, M)
    assert jnp.allclose(obj, obj_r, rtol=5e-4, atol=1e-2), (obj, obj_r)
    assert jnp.allclose(mc, mc_r, rtol=1e-5, atol=1e-4), (mc, mc_r)

    # --- test 2: same data, small block -> multi-step grid + 2-way split ----
    obj2, mc2 = top_opt_loss(volFracNN, phiElem, desiredMass,
                             densityOfMaterial, elemArea, penal, M,
                             block_n=128, n_split=2)
    jax.block_until_ready((obj2, mc2))
    assert jnp.allclose(obj2, obj_r, rtol=5e-4, atol=1e-2), (obj2, obj_r)
    assert jnp.allclose(mc2, mc_r, rtol=1e-5, atol=1e-4), (mc2, mc_r)

    # --- test 3: ragged N, scalar area, non-integer penal, forced split -----
    #     nblocks=5, n_split=2, steps=3 -> exercises the clamped index_map,
    #     the in-kernel tail mask, and one fully out-of-bounds grid step.
    N3, M3 = 521, 3
    penal3 = 2.5
    vf3 = 0.1 + 0.9 * jax.random.uniform(k3, (N3, M3), jnp.float32)
    phi3 = jax.random.uniform(k4, (M3, N3), jnp.float32)
    dens3 = jnp.array([1.0, 0.6, 0.3], jnp.float32)
    area3 = jnp.float32(0.5)
    desired3 = 40.0

    obj3, mc3 = top_opt_loss(vf3, phi3, desired3, dens3, area3, penal3, M3,
                             block_n=128, n_split=2)
    jax.block_until_ready((obj3, mc3))
    obj3_r, mc3_r = _reference(vf3, phi3, desired3, dens3, area3, penal3, M3)
    assert jnp.allclose(obj3, obj3_r, rtol=5e-4, atol=1e-2), (obj3, obj3_r)
    assert jnp.allclose(mc3, mc3_r, rtol=1e-5, atol=1e-4), (mc3, mc3_r)

    # --- test 4: same ragged problem with defaults (single full block) ------
    obj4, mc4 = top_opt_loss(vf3, phi3, desired3, dens3, area3, penal3, M3)
    jax.block_until_ready((obj4, mc4))
    assert jnp.allclose(obj4, obj3_r, rtol=5e-4, atol=1e-2), (obj4, obj3_r)
    assert jnp.allclose(mc4, mc3_r, rtol=1e-5, atol=1e-4), (mc4, mc3_r)

    print("KERNEL_OK")
</pallas_src>

<mosaic_0001>
module attributes {stable_mosaic.version = 11 : i64} {
  func.func @_toploss_kernel(%arg0: i32, %arg1: i32, %arg2: memref<4x512xf32, #tpu.memory_space<vmem>>, %arg3: memref<4x512xf32, #tpu.memory_space<vmem>>, %arg4: memref<1x512xf32, #tpu.memory_space<vmem>>, %arg5: memref<1x4x1xf32, #tpu.memory_space<vmem>>, %arg6: memref<1x4x1xf32, #tpu.memory_space<vmem>>, %arg7: memref<4x512xf32, #tpu.memory_space<vmem>>, %arg8: memref<4x512xf32, #tpu.memory_space<vmem>>) attributes {dimension_semantics = [#tpu.dimension_semantics<parallel>, #tpu.dimension_semantics<arbitrary>], iteration_bounds = array<i64: 1, 1>, scalar_prefetch = 0 : i64, scratch_operands = 2 : i64, tpu.core_type = #tpu.core_type<tc>, window_params = [{transform_indices = @transform_0, window_bounds = array<i64: 4, 512>}, {transform_indices = @transform_1, window_bounds = array<i64: 4, 512>}, {transform_indices = @transform_2, window_bounds = array<i64: 1, 512>}, {transform_indices = @transform_3, window_bounds = array<i64: 1, 4, 1>}, {transform_indices = @transform_4, window_bounds = array<i64: 1, 4, 1>}]} {
    %c1_i32 = arith.constant 1 : i32
    %0 = arith.muli %arg0, %c1_i32 : i32
    %1 = arith.addi %0, %arg1 : i32
    %c0_i32 = arith.constant 0 : i32
    %2 = arith.cmpi eq, %arg1, %c0_i32 : i32
    %3 = arith.extui %2 : i1 to i32
    %c0_i32_0 = arith.constant 0 : i32
    %4 = arith.cmpi ne, %3, %c0_i32_0 : i32
    scf.if %4 {
      %cst = arith.constant 0.000000e+00 : f32
      %17 = vector.broadcast %cst : f32 to vector<4x512xf32>
      %c0_12 = arith.constant 0 : index
      %c0_13 = arith.constant 0 : index
      %18 = vector.load %arg7[%c0_12, %c0_13] : memref<4x512xf32, #tpu.memory_space<vmem>>, vector<4x512xf32>
      tpu.vector_store %arg7[%c0_12, %c0_13], %17 {strides = array<i32>} : memref<4x512xf32, #tpu.memory_space<vmem>>, vector<4x512xf32>,
      %cst_14 = arith.constant 0.000000e+00 : f32
      %19 = vector.broadcast %cst_14 : f32 to vector<4x512xf32>
      %c0_15 = arith.constant 0 : index
      %c0_16 = arith.constant 0 : index
      %20 = vector.load %arg8[%c0_15, %c0_16] : memref<4x512xf32, #tpu.memory_space<vmem>>, vector<4x512xf32>
      tpu.vector_store %arg8[%c0_15, %c0_16], %19 {strides = array<i32>} : memref<4x512xf32, #tpu.memory_space<vmem>>, vector<4x512xf32>,
    } else {
    }
    %c0 = arith.constant 0 : index
    %c0_1 = arith.constant 0 : index
    %5 = vector.load %arg2[%c0, %c0_1] : memref<4x512xf32, #tpu.memory_space<vmem>>, vector<4x512xf32>
    %c0_2 = arith.constant 0 : index
    %c0_3 = arith.constant 0 : index
    %6 = vector.load %arg3[%c0_2, %c0_3] : memref<4x512xf32, #tpu.memory_space<vmem>>, vector<4x512xf32>
    %c0_4 = arith.constant 0 : index
    %c0_5 = arith.constant 0 : index
    %7 = vector.load %arg4[%c0_4, %c0_5] : memref<1x512xf32, #tpu.memory_space<vmem>>, vector<1x512xf32>
    %c0_i32_6 = arith.constant 0 : i32
    %8 = arith.cmpi slt, %1, %c0_i32_6 : i32
    %9 = arith.extui %8 : i1 to i32
    %c0_i32_7 = arith.constant 0 : i32
    %10 = arith.cmpi ne, %9, %c0_i32_7 : i32
    scf.if %10 {
      %17 = vector.broadcast %7 : vector<1x512xf32> to vector<4x512xf32>
      %18 = arith.mulf %5, %17 : vector<4x512xf32>
      %19 = arith.mulf %5, %5 : vector<4x512xf32>
      %20 = arith.mulf %5, %19 : vector<4x512xf32>
      %21 = tpu.reciprocal %20 {approx = true} : vector<4x512xf32> -> vector<4x512xf32>
      %22 = arith.mulf %20, %21 : vector<4x512xf32>
      %cst = arith.constant 2.000000e+00 : f32
      %23 = vector.broadcast %cst : f32 to vector<4x512xf32>
      %24 = arith.subf %23, %22 : vector<4x512xf32>
      %25 = arith.mulf %21, %24 : vector<4x512xf32>
      %c0_12 = arith.constant 0 : index
      %c0_13 = arith.constant 0 : index
      %26 = vector.load %arg7[%c0_12, %c0_13] : memref<4x512xf32, #tpu.memory_space<vmem>>, vector<4x512xf32>
      %27 = arith.mulf %6, %25 : vector<4x512xf32>
      %28 = arith.addf %26, %27 : vector<4x512xf32>
      %c0_14 = arith.constant 0 : index
      %c0_15 = arith.constant 0 : index
      %29 = vector.load %arg7[%c0_14, %c0_15] : memref<4x512xf32, #tpu.memory_space<vmem>>, vector<4x512xf32>
      tpu.vector_store %arg7[%c0_14, %c0_15], %28 {strides = array<i32>} : memref<4x512xf32, #tpu.memory_space<vmem>>, vector<4x512xf32>,
      %c0_16 = arith.constant 0 : index
      %c0_17 = arith.constant 0 : index
      %30 = vector.load %arg8[%c0_16, %c0_17] : memref<4x512xf32, #tpu.memory_space<vmem>>, vector<4x512xf32>
      %31 = arith.addf %30, %18 : vector<4x512xf32>
      %c0_18 = arith.constant 0 : index
      %c0_19 = arith.constant 0 : index
      %32 = vector.load %arg8[%c0_18, %c0_19] : memref<4x512xf32, #tpu.memory_space<vmem>>, vector<4x512xf32>
      tpu.vector_store %arg8[%c0_18, %c0_19], %31 {strides = array<i32>} : memref<4x512xf32, #tpu.memory_space<vmem>>, vector<4x512xf32>,
    } else {
    }
    %c0_i32_8 = arith.constant 0 : i32
    %11 = arith.cmpi sge, %1, %c0_i32_8 : i32
    %12 = arith.extui %11 : i1 to i32
    %c0_i32_9 = arith.constant 0 : i32
    %13 = arith.cmpi ne, %12, %c0_i32_9 : i32
    scf.if %13 {
      %17 = tpu.iota {dimensions = array<i32: 1>} : vector<4x512xi32>
      %c512_i32 = arith.constant 512 : i32
      %18 = arith.muli %1, %c512_i32 : i32
      %19 = vector.broadcast %18 : i32 to vector<4x512xi32>
      %20 = arith.addi %19, %17 : vector<4x512xi32>
      %c512_i32_12 = arith.constant 512 : i32
      %21 = vector.broadcast %c512_i32_12 : i32 to vector<4x512xi32>
      %22 = arith.cmpi slt, %20, %21 : vector<4x512xi32>
      %cst = arith.constant 1.000000e+00 : f32
      %23 = vector.broadcast %cst : f32 to vector<4x512xf32>
      %24 = arith.select %22, %5, %23 : vector<4x512xi1>, vector<4x512xf32>
      %cst_13 = arith.constant 0.000000e+00 : f32
      %25 = vector.broadcast %cst_13 : f32 to vector<4x512xf32>
      %26 = arith.select %22, %6, %25 : vector<4x512xi1>, vector<4x512xf32>
      %27 = vector.broadcast %7 : vector<1x512xf32> to vector<4x512xf32>
      %28 = arith.mulf %5, %27 : vector<4x512xf32>
      %cst_14 = arith.constant 0.000000e+00 : f32
      %29 = vector.broadcast %cst_14 : f32 to vector<4x512xf32>
      %30 = arith.select %22, %28, %29 : vector<4x512xi1>, vector<4x512xf32>
      %31 = arith.mulf %24, %24 : vector<4x512xf32>
      %32 = arith.mulf %24, %31 : vector<4x512xf32>
      %33 = tpu.reciprocal %32 {approx = true} : vector<4x512xf32> -> vector<4x512xf32>
      %34 = arith.mulf %32, %33 : vector<4x512xf32>
      %cst_15 = arith.constant 2.000000e+00 : f32
      %35 = vector.broadcast %cst_15 : f32 to vector<4x512xf32>
      %36 = arith.subf %35, %34 : vector<4x512xf32>
      %37 = arith.mulf %33, %36 : vector<4x512xf32>
      %c0_16 = arith.constant 0 : index
      %c0_17 = arith.constant 0 : index
      %38 = vector.load %arg7[%c0_16, %c0_17] : memref<4x512xf32, #tpu.memory_space<vmem>>, vector<4x512xf32>
      %39 = arith.mulf %26, %37 : vector<4x512xf32>
      %40 = arith.addf %38, %39 : vector<4x512xf32>
      %c0_18 = arith.constant 0 : index
      %c0_19 = arith.constant 0 : index
      %41 = vector.load %arg7[%c0_18, %c0_19] : memref<4x512xf32, #tpu.memory_space<vmem>>, vector<4x512xf32>
      tpu.vector_store %arg7[%c0_18, %c0_19], %40 {strides = array<i32>} : memref<4x512xf32, #tpu.memory_space<vmem>>, vector<4x512xf32>,
      %c0_20 = arith.constant 0 : index
      %c0_21 = arith.constant 0 : index
      %42 = vector.load %arg8[%c0_20, %c0_21] : memref<4x512xf32, #tpu.memory_space<vmem>>, vector<4x512xf32>
      %43 = arith.addf %42, %30 : vector<4x512xf32>
      %c0_22 = arith.constant 0 : index
      %c0_23 = arith.constant 0 : index
      %44 = vector.load %arg8[%c0_22, %c0_23] : memref<4x512xf32, #tpu.memory_space<vmem>>, vector<4x512xf32>
      tpu.vector_store %arg8[%c0_22, %c0_23], %43 {strides = array<i32>} : memref<4x512xf32, #tpu.memory_space<vmem>>, vector<4x512xf32>,
    } else {
    }
    %c0_i32_10 = arith.constant 0 : i32
    %14 = arith.cmpi eq, %arg1, %c0_i32_10 : i32
    %15 = arith.extui %14 : i1 to i32
    %c0_i32_11 = arith.constant 0 : i32
    %16 = arith.cmpi ne, %15, %c0_i32_11 : i32
    scf.if %16 {
      %c0_12 = arith.constant 0 : index
      %c0_13 = arith.constant 0 : index
      %17 = vector.load %arg7[%c0_12, %c0_13] : memref<4x512xf32, #tpu.memory_space<vmem>>, vector<4x512xf32>
      %cst = arith.constant dense<0.000000e+00> : vector<4xf32>
      %18 = vector.multi_reduction <add>, %17, %cst [1] : vector<4x512xf32> to vector<4xf32>
      %19 = vector.shape_cast %18 : vector<4xf32> to vector<4x1xf32>
      %c0_14 = arith.constant 0 : index
      %c0_15 = arith.constant 0 : index
      %c0_16 = arith.constant 0 : index
      %20 = vector.load %arg5[%c0_14, %c0_15, %c0_16] : memref<1x4x1xf32, #tpu.memory_space<vmem>>, vector<1x4x1xf32>
      %21 = vector.shape_cast %20 : vector<1x4x1xf32> to vector<4x1xf32>
      %22 = vector.shape_cast %19 : vector<4x1xf32> to vector<1x4x1xf32>
      tpu.vector_store %arg5[%c0_14, %c0_15, %c0_16], %22 {strides = array<i32>} : memref<1x4x1xf32, #tpu.memory_space<vmem>>, vector<1x4x1xf32>,
      %c0_17 = arith.constant 0 : index
      %c0_18 = arith.constant 0 : index
      %23 = vector.load %arg8[%c0_17, %c0_18] : memref<4x512xf32, #tpu.memory_space<vmem>>, vector<4x512xf32>
      %cst_19 = arith.constant dense<0.000000e+00> : vector<4xf32>
      %24 = vector.multi_reduction <add>, %23, %cst_19 [1] : vector<4x512xf32> to vector<4xf32>
      %25 = vector.shape_cast %24 : vector<4xf32> to vector<4x1xf32>
      %c0_20 = arith.constant 0 : index
      %c0_21 = arith.constant 0 : index
      %c0_22 = arith.constant 0 : index
      %26 = vector.load %arg6[%c0_20, %c0_21, %c0_22] : memref<1x4x1xf32, #tpu.memory_space<vmem>>, vector<1x4x1xf32>
      %27 = vector.shape_cast %26 : vector<1x4x1xf32> to vector<4x1xf32>
      %28 = vector.shape_cast %25 : vector<4x1xf32> to vector<1x4x1xf32>
      tpu.vector_store %arg6[%c0_20, %c0_21, %c0_22], %28 {strides = array<i32>} : memref<1x4x1xf32, #tpu.memory_space<vmem>>, vector<1x4x1xf32>,
    } else {
    }
    return
  }
  func.func @transform_0(%arg0: i32, %arg1: i32) -> (i32, i32) {
    %c1_i32 = arith.constant 1 : i32
    %0 = arith.muli %arg0, %c1_i32 : i32
    %1 = arith.addi %0, %arg1 : i32
    %c0_i32 = arith.constant 0 : i32
    %2 = arith.minsi %1, %c0_i32 : i32
    %c0_i32_0 = arith.constant 0 : i32
    %c0_i32_1 = arith.constant 0 : i32
    return %c0_i32_0, %2 : i32, i32
  }
  func.func @transform_1(%arg0: i32, %arg1: i32) -> (i32, i32) {
    %c1_i32 = arith.constant 1 : i32
    %0 = arith.muli %arg0, %c1_i32 : i32
    %1 = arith.addi %0, %arg1 : i32
    %c0_i32 = arith.constant 0 : i32
    %2 = arith.minsi %1, %c0_i32 : i32
    %c0_i32_0 = arith.constant 0 : i32
    %c0_i32_1 = arith.constant 0 : i32
    return %c0_i32_0, %2 : i32, i32
  }
  func.func @transform_2(%arg0: i32, %arg1: i32) -> (i32, i32) {
    %c1_i32 = arith.constant 1 : i32
    %0 = arith.muli %arg0, %c1_i32 : i32
    %1 = arith.addi %0, %arg1 : i32
    %c0_i32 = arith.constant 0 : i32
    %2 = arith.minsi %1, %c0_i32 : i32
    %c0_i32_0 = arith.constant 0 : i32
    %c0_i32_1 = arith.constant 0 : i32
    return %c0_i32_0, %2 : i32, i32
  }
  func.func @transform_3(%arg0: i32, %arg1: i32) -> (i32, i32, i32) {
    %c0_i32 = arith.constant 0 : i32
    %c0_i32_0 = arith.constant 0 : i32
    %c0_i32_1 = arith.constant 0 : i32
    return %arg0, %c0_i32, %c0_i32_0 : i32, i32, i32
  }
  func.func @transform_4(%arg0: i32, %arg1: i32) -> (i32, i32, i32) {
    %c0_i32 = arith.constant 0 : i32
    %c0_i32_0 = arith.constant 0 : i32
    %c0_i32_1 = arith.constant 0 : i32
    return %arg0, %c0_i32, %c0_i32_0 : i32, i32, i32
  }
}

</mosaic_0001>

<llo_original>
// kernel: tpu_custom_call.1
$region0: #{tpu_custom_call.1}
  #allocation0 [shape = 'u32[]', space=smem, size = 0x4, offset = 0x4, fixed_abs, tag = 'smem constant byte address 0x4 - core index']
  #allocation1 [shape = 'u32[144,128]{1,0:T(1,128)}', space=vmem, size = 0x12000, scoped, tag = 'internal scratch']
  #allocation2 [shape = 'f32[4,512]{1,0:T(4,128)}', space=vmem, size = 0x2000, scoped, tag = 'scratch operand']
  #allocation3 [shape = 'f32[4,512]{1,0:T(4,128)}', space=vmem, size = 0x2000, scoped, tag = 'scratch operand']
  %s0 = inlined_call_operand.hbm [shape: f32[4,512], index: 0, kind: input, shape index: {}]
  %s1 = inlined_call_operand.hbm [shape: f32[4,512], index: 1, kind: input, shape index: {}]
  %s2 = inlined_call_operand.vmem [shape: f32[1,512], index: 2, kind: input, shape index: {}]
  %s3 = inlined_call_operand.vmem [shape: f32[1,4,1], index: 3, kind: output, shape index: {0}]
  %s4 = inlined_call_operand.vmem [shape: f32[1,4,1], index: 4, kind: output, shape index: {1}]
  %5 = xla_tuple %s3, %s4
  %s6 = sld [smem:[#allocation0]]
  $region54: #{tpu_custom_call.1} parent=0
    _
  %s8 = ssub.s32 1, %s6
  %s9 = scalar_select 0, %s8, %s6
  $region1: #{tpu_custom_call.1} parent=0
    #allocation4 [shape = 'u8[8192]{0}', space=vmem, size = 0x2000, scoped, tag = 'input window, operand 0, single buffered']
    #allocation5 [shape = 's32[1]{0}', space=sflag, size = 0x4, scoped, tag = 'scoped memory for tpu_custom_call.1']
    #allocation6 [shape = 'u8[8192]{0}', space=vmem, size = 0x2000, scoped, tag = 'input window, operand 1, single buffered']
    #allocation7 [shape = 's32[1]{0}', space=sflag, size = 0x4, scoped, tag = 'scoped memory for tpu_custom_call.1']
    %10 = vsyncpa [#allocation5], 0
    %11 = vsyncpa [#allocation7], 0
    // Predicated region
    $region2: #{tpu_custom_call.1} parent=1 // pred_check
      _
    $region3: #{tpu_custom_call.1} parent=1 // pred_check_branch
      %13 = sbr.rel (0) target = $region5
    $region4: #{tpu_custom_call.1} parent=1 // pred_region
      %s14 = sadd.s32 0, 0
      %p15 = scmp.lt.s32.totalorder %s14, 0
      %s16 = scalar_select %p15, %s14, 0
      %s17 = smul.u32 4, %s16
      %s19 = ssub.s32 256, 256
      %20 = vsyncadd [#allocation5], %s19
      %s21 = smul.addr %s17, 64
      %s22 = scalar_lea.hbm %s0, %s21
      %s24 = sshll.u32 [#allocation4], 4
      %s25 = int_to_ptr.vmem [resolvable:$true] %s24
      %27 = dma.hbm_to_vmem [thread:$0]  %s22, 256, %s25, [#allocation5]
    $region5: #{tpu_custom_call.1} parent=1 // pred_fallthru
      _
    // Predicated region
    $region6: #{tpu_custom_call.1} parent=1 // pred_check
      _
    $region7: #{tpu_custom_call.1} parent=1 // pred_check_branch
      %29 = sbr.rel (0) target = $region9
    $region8: #{tpu_custom_call.1} parent=1 // pred_region
      %s30 = sadd.s32 0, 0
      %p31 = scmp.lt.s32.totalorder %s30, 0
      %s32 = scalar_select %p31, %s30, 0
      %s33 = smul.u32 4, %s32
      %s35 = ssub.s32 256, 256
      %36 = vsyncadd [#allocation7], %s35
      %s37 = smul.addr %s33, 64
      %s38 = scalar_lea.hbm %s1, %s37
      %s40 = sshll.u32 [#allocation6], 4
      %s41 = int_to_ptr.vmem [resolvable:$true] %s40
      %43 = dma.hbm_to_vmem [thread:$0]  %s38, 256, %s41, [#allocation7]
    $region9: #{tpu_custom_call.1} parent=1 // pred_fallthru
      _
    // Predicated region
    $region10: #{tpu_custom_call.1} parent=1 // pred_check
      _
    $region11: #{tpu_custom_call.1} parent=1 // pred_check_branch
      %45 = sbr.rel (0) target = $region13
    $region12: #{tpu_custom_call.1} parent=1 // pred_region
      %s46 = sadd.s32 0, 0
      %p47 = scmp.lt.s32.totalorder %s46, 0
      %s48 = scalar_select %p47, %s46, 0
      %s49 = smul.u32 4, %s48
      %p50 = scmp.lt.s32.totalorder %s49, 3
      %s51 = scalar_select %p50, %s49, 3
      %s52 = scalar_lea.vmem %s2, %s51
      %s53 = sadd.s32 0, 0
      %p54 = scmp.lt.s32.totalorder %s53, 0
      %s55 = scalar_select %p54, %s53, 0
      %s56 = smul.u32 4, %s55
    $region13: #{tpu_custom_call.1} parent=1 // pred_fallthru
      _
    // Predicated region
    $region14: #{tpu_custom_call.1} parent=1 // pred_check
      _
    $region15: #{tpu_custom_call.1} parent=1 // pred_check_branch
      %58 = sbr.rel (0) target = $region17
    $region16: #{tpu_custom_call.1} parent=1 // pred_region
      %59 = dma.done [#allocation5], 256
    $region17: #{tpu_custom_call.1} parent=1 // pred_fallthru
      _
    // Predicated region
    $region18: #{tpu_custom_call.1} parent=1 // pred_check
      _
    $region19: #{tpu_custom_call.1} parent=1 // pred_check_branch
      %61 = sbr.rel (0) target = $region21
    $region20: #{tpu_custom_call.1} parent=1 // pred_region
      %62 = dma.done [#allocation7], 256
    $region21: #{tpu_custom_call.1} parent=1 // pred_fallthru
      _
    %s63 = sadd.s32 0, 0
    %p64 = scmp.lt.s32.totalorder %s63, 0
    %s65 = scalar_select %p64, %s63, 0
    %s66 = smul.u32 4, %s65
    %p67 = scmp.lt.s32.totalorder %s66, 3
    %s68 = scalar_select %p67, %s66, 3
    %s69 = scalar_lea.vmem %s2, %s68
    %s70 = sadd.s32 0, 0
    %p71 = scmp.lt.s32.totalorder %s70, 0
    %s72 = scalar_select %p71, %s70, 0
    %s73 = smul.u32 4, %s72
    %s74 = sadd.s32 0, 0
    %p75 = scmp.lt.s32.totalorder %s74, 0
    %s76 = scalar_select %p75, %s74, 0
    %s77 = smul.u32 4, %s76
    %s78 = sadd.s32 0, 0
    %p79 = scmp.lt.s32.totalorder %s78, 0
    %s80 = scalar_select %p79, %s78, 0
    %s81 = smul.u32 4, %s80
    %p82 = scmp.lt.s32.totalorder %s81, 3
    %s83 = scalar_select %p82, %s81, 3
    %s84 = scalar_lea.vmem %s2, %s83
    %s85 = sadd.s32 0, 0
    %p86 = scmp.lt.s32.totalorder %s85, 0
    %s87 = scalar_select %p86, %s85, 0
    %s88 = smul.u32 4, %s87
    %s89 = sadd.s32 0, 0
    %p90 = scmp.eq.s32.totalorder 0, 0
    // Predicated region
    $region22: #{tpu_custom_call.1} parent=1 // pred_check
      %p91 = pneg %p90
    $region23: #{tpu_custom_call.1} parent=1 // pred_check_branch
      %93 = sbr.rel (%p91) target = $region25
    $region24: #{tpu_custom_call.1} parent=1 // pred_region
      %94 = vst [vmem:[#allocation2] sm:$0xff] 0.0
      %95 = vst [vmem:[#allocation2 + $0x8] sm:$0xff] 0.0
      %96 = vst [vmem:[#allocation3] sm:$0xff] 0.0
      %97 = vst [vmem:[#allocation3 + $0x8] sm:$0xff] 0.0
    $region25: #{tpu_custom_call.1} parent=1 // pred_fallthru
      _
    %v98 = vld [vmem:[#allocation4] sm:$0xff]
    %v99 = vld [vmem:[#allocation4 + $0x8] sm:$0xff]
    %v100 = vld [vmem:[#allocation6] sm:$0xff]
    %v101 = vld [vmem:[#allocation6 + $0x8] sm:$0xff]
    %v102 = vld [vmem:[%s84] sm:$0xf]
    %p103 = scmp.lt.s32.totalorder %s89, 0
    // Predicated region
    $region26: #{tpu_custom_call.1} parent=1 // pred_check
      %p104 = pneg %p103
    $region27: #{tpu_custom_call.1} parent=1 // pred_check_branch
      %106 = sbr.rel (%p104) target = $region29
    $region28: #{tpu_custom_call.1} parent=1 // pred_region
      %v108 = vlaneseq
      %v109 = vshrl.u32 %v108, 7
      %v110 = vsub.s32 0, %v109
      %v111 = vrot.slane %v102, %v110
      %v112 = vlaneseq
      %v113 = vshrl.u32 %v112, 7
      %v114 = vsub.s32 1, %v113
      %v115 = vrot.slane %v102, %v114
      %v116 = vlaneseq
      %v117 = vshrl.u32 %v116, 7
      %v118 = vsub.s32 2, %v117
      %v119 = vrot.slane %v102, %v118
      %v120 = vlaneseq
      %v121 = vshrl.u32 %v120, 7
      %v122 = vsub.s32 3, %v121
      %v123 = vrot.slane %v102, %v122
      %v124 = vcombine.low %v111, %v115
      %v125 = vcombine.low %v119, %v123
      %v128 = vmul.f32 %v98, %v124
      %v129 = vmul.f32 %v99, %v125
      %v130 = vmul.f32 %v98, %v98
      %v131 = vmul.f32 %v99, %v99
      %v132 = vmul.f32 %v98, %v130
      %v133 = vmul.f32 %v99, %v131
      %v134 = vrcp.pop %v132
      %v135 = vrcp.pop %v133
      %v136 = vmul.f32 %v132, %v134
      %v137 = vmul.f32 %v133, %v135
      %v138 = vsub.f32 2.0, %v136
      %v139 = vsub.f32 2.0, %v137
      %v140 = vmul.f32 %v134, %v138
      %v141 = vmul.f32 %v135, %v139
      %v142 = vld [vmem:[#allocation2] sm:$0xff]
      %v143 = vld [vmem:[#allocation2 + $0x8] sm:$0xff]
      %v144 = vmul.f32 %v100, %v140
      %v145 = vmul.f32 %v101, %v141
      %v146 = vadd.f32 %v142, %v144
      %v147 = vadd.f32 %v143, %v145
      %148 = vst [vmem:[#allocation2] sm:$0xff] %v146
      %149 = vst [vmem:[#allocation2 + $0x8] sm:$0xff] %v147
      %v150 = vld [vmem:[#allocation3] sm:$0xff]
      %v151 = vld [vmem:[#allocation3 + $0x8] sm:$0xff]
      %v152 = vadd.f32 %v150, %v128
      %v153 = vadd.f32 %v151, %v129
      %154 = vst [vmem:[#allocation3] sm:$0xff] %v152
      %155 = vst [vmem:[#allocation3 + $0x8] sm:$0xff] %v153
    $region29: #{tpu_custom_call.1} parent=1 // pred_fallthru
      _
    %p156 = scmp.ge.s32.totalorder %s89, 0
    // Predicated region
    $region30: #{tpu_custom_call.1} parent=1 // pred_check
      %p157 = pneg %p156
    $region31: #{tpu_custom_call.1} parent=1 // pred_check_branch
      %159 = sbr.rel (%p157) target = $region33
    $region32: #{tpu_custom_call.1} parent=1 // pred_region
      %v160 = vlaneseq
      %v161 = vand.u32 %v160, 127
      %v162 = vadd.s32 %v161, 128
      %v163 = vadd.s32 %v161, 256
      %v164 = vadd.s32 %v161, 384
      %s165 = smul.u32 %s89, 512
      %v166 = vstv %s165
      %v167 = vadd.s32 %v166, %v161
      %v168 = vadd.s32 %v166, %v162
      %v169 = vadd.s32 %v166, %v163
      %v170 = vadd.s32 %v166, %v164
      %vm171 = vcmp.lt.s32.totalorder %v167, 512
      %vm172 = vcmp.lt.s32.totalorder %v168, 512
      %vm173 = vcmp.lt.s32.totalorder %v169, 512
      %vm174 = vcmp.lt.s32.totalorder %v170, 512
      %v177 = vcombine.high %v98, %v98
      %v178 = vcombine.high %v99, %v99
      %v181 = vsel %vm171, %v98, 1.0
      %v182 = vsel %vm172, %v177, 1.0
      %v183 = vsel %vm173, %v99, 1.0
      %v184 = vsel %vm174, %v178, 1.0
      %v187 = vcombine.high %v100, %v100
      %v188 = vcombine.high %v101, %v101
      %v191 = vsel %vm171, %v100, 0.0
      %v192 = vsel %vm172, %v187, 0.0
      %v193 = vsel %vm173, %v101, 0.0
      %v194 = vsel %vm174, %v188, 0.0
      %v196 = vlaneseq
      %v197 = vshrl.u32 %v196, 7
      %v198 = vsub.s32 0, %v197
      %v199 = vrot.slane %v102, %v198
      %v200 = vlaneseq
      %v201 = vshrl.u32 %v200, 7
      %v202 = vsub.s32 1, %v201
      %v203 = vrot.slane %v102, %v202
      %v204 = vlaneseq
      %v205 = vshrl.u32 %v204, 7
      %v206 = vsub.s32 2, %v205
      %v207 = vrot.slane %v102, %v206
      %v208 = vlaneseq
      %v209 = vshrl.u32 %v208, 7
      %v210 = vsub.s32 3, %v209
      %v211 = vrot.slane %v102, %v210
      %v212 = vcombine.low %v199, %v203
      %v213 = vcombine.low %v207, %v211
      %v216 = vmul.f32 %v98, %v212
      %v217 = vmul.f32 %v99, %v213
      %v220 = vcombine.high %v216, %v216
      %v221 = vcombine.high %v217, %v217
      %v224 = vsel %vm171, %v216, 0.0
      %v225 = vsel %vm172, %v220, 0.0
      %v226 = vsel %vm173, %v217, 0.0
      %v227 = vsel %vm174, %v221, 0.0
      %v228 = vmul.f32 %v181, %v181
      %v229 = vmul.f32 %v182, %v182
      %v230 = vmul.f32 %v183, %v183
      %v231 = vmul.f32 %v184, %v184
      %v232 = vmul.f32 %v181, %v228
      %v233 = vmul.f32 %v182, %v229
      %v234 = vmul.f32 %v183, %v230
      %v235 = vmul.f32 %v184, %v231
      %v236 = vrcp.pop %v232
      %v237 = vrcp.pop %v233
      %v238 = vrcp.pop %v234
      %v239 = vrcp.pop %v235
      %v240 = vmul.f32 %v232, %v236
      %v241 = vmul.f32 %v233, %v237
      %v242 = vmul.f32 %v234, %v238
      %v243 = vmul.f32 %v235, %v239
      %v244 = vsub.f32 2.0, %v240
      %v245 = vsub.f32 2.0, %v241
      %v246 = vsub.f32 2.0, %v242
      %v247 = vsub.f32 2.0, %v243
      %v248 = vmul.f32 %v236, %v244
      %v249 = vmul.f32 %v237, %v245
      %v250 = vmul.f32 %v238, %v246
      %v251 = vmul.f32 %v239, %v247
      %v252 = vld [vmem:[#allocation2] sm:$0xff]
      %v253 = vld [vmem:[#allocation2 + $0x8] sm:$0xff]
      %v254 = vmul.f32 %v191, %v248
      %v255 = vmul.f32 %v192, %v249
      %v256 = vmul.f32 %v193, %v250
      %v257 = vmul.f32 %v194, %v251
      %v262 = vcombine.low %v254, %v255
      %v263 = vcombine.low %v256, %v257
      %v266 = vadd.f32 %v252, %v262
      %v267 = vadd.f32 %v253, %v263
      %268 = vst [vmem:[#allocation2] sm:$0xff] %v266
      %269 = vst [vmem:[#allocation2 + $0x8] sm:$0xff] %v267
      %v270 = vld [vmem:[#allocation3] sm:$0xff]
      %v271 = vld [vmem:[#allocation3 + $0x8] sm:$0xff]
      %v276 = vcombine.low %v224, %v225
      %v277 = vcombine.low %v226, %v227
      %v280 = vadd.f32 %v270, %v276
      %v281 = vadd.f32 %v271, %v277
      %282 = vst [vmem:[#allocation3] sm:$0xff] %v280
      %283 = vst [vmem:[#allocation3 + $0x8] sm:$0xff] %v281
    $region33: #{tpu_custom_call.1} parent=1 // pred_fallthru
      _
    // Predicated region
    $region34: #{tpu_custom_call.1} parent=1 // pred_check
      %p284 = pneg %p90
    $region35: #{tpu_custom_call.1} parent=1 // pred_check_branch
      %286 = sbr.rel (%p284) target = $region37
    $region36: #{tpu_custom_call.1} parent=1 // pred_region
      %v287 = vld [vmem:[#allocation2] sm:$0xff]
      %v288 = vld [vmem:[#allocation2 + $0x8] sm:$0xff]
      %v291 = vcombine.high %v287, %v287
      %v292 = vcombine.high %v288, %v288
      %vm295 = vcmask 1043456
      %v296 = vsel %vm295, %v287, 0.0
      %v297 = vsel %vm295, %v291, 0.0
      %v298 = vadd.f32 %v296, %v297
      %v299 = vsel %vm295, %v288, 0.0
      %v300 = vadd.f32 %v298, %v299
      %v301 = vsel %vm295, %v292, 0.0
      %v302 = vadd.f32 %v300, %v301
      %303 = vadd.xlane.f32.xlu0 %v302
      %v304 = vpop.xlane.xlu0 %303
      %vm305 = vcmask 3072
      %306 = vst.msk [vmem:[%s3] sm:$0xf] %vm305, %v304
      %v307 = vld [vmem:[#allocation3] sm:$0xff]
      %v308 = vld [vmem:[#allocation3 + $0x8] sm:$0xff]
      %v311 = vcombine.high %v307, %v307
      %v312 = vcombine.high %v308, %v308
      %v315 = vsel %vm295, %v307, 0.0
      %v316 = vsel %vm295, %v311, 0.0
      %v317 = vadd.f32 %v315, %v316
      %v318 = vsel %vm295, %v308, 0.0
      %v319 = vadd.f32 %v317, %v318
      %v320 = vsel %vm295, %v312, 0.0
      %v321 = vadd.f32 %v319, %v320
      %322 = vadd.xlane.f32.xlu0 %v321
      %v323 = vpop.xlane.xlu0 %322
      %324 = vst.msk [vmem:[%s4] sm:$0xf] %vm305, %v323
    $region37: #{tpu_custom_call.1} parent=1 // pred_fallthru
      _
    // Predicated region
    $region38: #{tpu_custom_call.1} parent=1 // pred_check
      _
    $region39: #{tpu_custom_call.1} parent=1 // pred_check_branch
      %326 = sbr.rel (0) target = $region41
    $region40: #{tpu_custom_call.1} parent=1 // pred_region
      _
    $region41: #{tpu_custom_call.1} parent=1 // pred_fallthru
      _
    // Predicated region
    $region42: #{tpu_custom_call.1} parent=1 // pred_check
      _
    $region43: #{tpu_custom_call.1} parent=1 // pred_check_branch
      %328 = sbr.rel (0) target = $region45
    $region44: #{tpu_custom_call.1} parent=1 // pred_region
      _
    $region45: #{tpu_custom_call.1} parent=1 // pred_fallthru
      _
    // Predicated region
    $region46: #{tpu_custom_call.1} parent=1 // pred_check
      _
    $region47: #{tpu_custom_call.1} parent=1 // pred_check_branch
      %330 = sbr.rel (0) target = $region49
    $region48: #{tpu_custom_call.1} parent=1 // pred_region
      _
    $region49: #{tpu_custom_call.1} parent=1 // pred_fallthru
      _
    // Predicated region
    $region50: #{tpu_custom_call.1} parent=1 // pred_check
      _
    $region51: #{tpu_custom_call.1} parent=1 // pred_check_branch
      %332 = sbr.rel (0) target = $region53
    $region52: #{tpu_custom_call.1} parent=1 // pred_region
      _
    $region53: #{tpu_custom_call.1} parent=1 // pred_fallthru
      _
    %333 = vsyncpa [#allocation5], 1
    %334 = vsyncpa [#allocation7], 1

</llo_original>
